<compile_context>
chip_gen: v7x
topology: tpu7x:2x2x1
jax: 0.10.0
libtpu: 0.0.40
codegen_flags: <defaults>
</compile_context>

<pallas_src>
import functools

import jax
import jax.numpy as jnp
from jax import lax
from jax.experimental import pallas as pl
from jax.experimental.pallas import tpu as pltpu


def _round_up(x, m):
    return ((x + m - 1) // m) * m


def _embedding_kernel(idx_ref, table_ref, out_ref, *, pack, num_cats):
    # idx_ref:   VMEM (rows_pp, pack) int32     -- `pack` flat indices per output row
    # table_ref: VMEM (pack*num_cats, pack*D)   -- block-diagonal packed table
    # out_ref:   VMEM (rows_pp, pack*D)         -- lane-dense packed output
    idx = idx_ref[...]
    rows_pp = idx.shape[0]
    cat_iota = lax.broadcasted_iota(jnp.int32, (rows_pp, num_cats), 1)

    # One-hot encode each of the `pack` index slots into its own num_cats-wide
    # column band.  An out-of-range index simply yields an all-zero row.
    slots = [
        (idx[:, j:j + 1] == cat_iota).astype(table_ref.dtype)
        for j in range(pack)
    ]
    onehot = slots[0] if pack == 1 else jnp.concatenate(slots, axis=1)

    # MXU contraction: (rows_pp, pack*num_cats) @ (pack*num_cats, pack*D).
    # HIGHEST precision keeps the f32 table values exact through the one-hot
    # selection (the selection work is tiny; the kernel is store-bandwidth bound).
    out_ref[...] = jnp.dot(
        onehot,
        table_ref[...],
        precision=lax.Precision.HIGHEST,
        preferred_element_type=jnp.float32,
    ).astype(out_ref.dtype)


def category_embeddings(cat_idx, table, *, block_rows=1024):
    """Pallas embedding lookup: returns table[cat_idx] with shape cat_idx.shape + (D,)."""
    num_cats, embed_dim = table.shape
    orig_shape = cat_idx.shape
    flat_idx = cat_idx.reshape(-1).astype(jnp.int32)
    n = flat_idx.shape[0]

    # Lane-dense packing factor: pack `pack` embedding rows per 128-lane output row.
    if embed_dim < 128 and 128 % embed_dim == 0:
        pack = 128 // embed_dim
    else:
        pack = 1

    # rows-per-step (in packed rows) must stay a multiple of 8 (sublane tiling).
    row_align = 8 * pack
    br = min(block_rows, _round_up(n, row_align))   # clamp for tiny inputs -> 1 grid step
    br = _round_up(br, row_align)
    n_pad = _round_up(n, br)
    if n_pad != n:
        flat_idx = jnp.concatenate(
            [flat_idx, jnp.zeros((n_pad - n,), jnp.int32)], axis=0
        )

    rows_pp = br // pack                      # packed output rows per grid step
    idx2d = flat_idx.reshape(n_pad // pack, pack)

    # Block-diagonal packed table: row (j*num_cats + c) holds table[c] in column band j.
    if pack > 1:
        table_packed = jnp.kron(jnp.eye(pack, dtype=table.dtype), table)
    else:
        table_packed = table
    tp_rows, tp_cols = table_packed.shape     # (pack*num_cats, pack*embed_dim)

    grid = (n_pad // br,)

    out = pl.pallas_call(
        functools.partial(_embedding_kernel, pack=pack, num_cats=num_cats),
        out_shape=jax.ShapeDtypeStruct((n_pad // pack, tp_cols), table.dtype),
        grid=grid,
        in_specs=[
            # Index block: tiled VMEM int32 input (pipelines like any other input).
            pl.BlockSpec((rows_pp, pack), lambda i: (i, 0)),
            # Small packed table: fully resident, constant block index (no re-DMA
            # across grid steps).
            pl.BlockSpec((tp_rows, tp_cols), lambda i: (0, 0)),
        ],
        out_specs=pl.BlockSpec((rows_pp, tp_cols), lambda i: (i, 0)),
        compiler_params=pltpu.CompilerParams(
            dimension_semantics=("parallel",),
        ),
    )(idx2d, table_packed)

    # Unpack: (n_pad/pack, pack*D) -> (n_pad, D) -> original shape + (D,)
    return out.reshape(n_pad, embed_dim)[:n].reshape(*orig_shape, embed_dim)


if __name__ == "__main__":
    num_cats = 32
    embedding_dim = 32
    batch, seq = 2, 8

    key = jax.random.PRNGKey(0)
    k_table, k_idx = jax.random.split(key)

    # nn.Embedding default init: weight ~ N(0, 1)
    table = jax.random.normal(k_table, (num_cats, embedding_dim), dtype=jnp.float32)
    cat_idx = jax.random.randint(k_idx, (batch, seq), 0, num_cats, dtype=jnp.int32)

    out = category_embeddings(cat_idx, table)
    out = jax.block_until_ready(out)

    # Reference check against plain JAX gather (== PyTorch embedding lookup).
    ref = table[cat_idx]
    assert out.shape == (batch, seq, embedding_dim), out.shape
    assert jnp.allclose(out, ref, rtol=1e-6, atol=1e-6), "mismatch vs reference gather"

    print("KERNEL_OK")
</pallas_src>

<mosaic_0001>
module attributes {stable_mosaic.version = 11 : i64} {
  func.func @_embedding_kernel(%arg0: i32, %arg1: memref<8x4xi32, #tpu.memory_space<vmem>>, %arg2: memref<128x128xf32, #tpu.memory_space<vmem>>, %arg3: memref<8x128xf32, #tpu.memory_space<vmem>>) attributes {dimension_semantics = [#tpu.dimension_semantics<parallel>], iteration_bounds = array<i64: 1>, scalar_prefetch = 0 : i64, scratch_operands = 0 : i64, tpu.core_type = #tpu.core_type<tc>, window_params = [{transform_indices = @transform_0, window_bounds = array<i64: 8, 4>}, {pipeline_mode = #tpu.pipeline_mode<synchronous>, transform_indices = @transform_1, window_bounds = array<i64: 128, 128>}, {transform_indices = @transform_2, window_bounds = array<i64: 8, 128>}]} {
    %c0 = arith.constant 0 : index
    %c0_0 = arith.constant 0 : index
    %0 = vector.load %arg1[%c0, %c0_0] : memref<8x4xi32, #tpu.memory_space<vmem>>, vector<8x4xi32>
    %1 = tpu.iota {dimensions = array<i32: 1>} : vector<8x32xi32>
    %2 = vector.extract_strided_slice %0 {offsets = [0, 0], sizes = [8, 1], strides = [1, 1]} : vector<8x4xi32> to vector<8x1xi32>
    %3 = vector.broadcast %2 : vector<8x1xi32> to vector<8x32xi32>
    %4 = arith.cmpi eq, %3, %1 : vector<8x32xi32>
    %5 = arith.extui %4 : vector<8x32xi1> to vector<8x32xi32>
    %6 = arith.sitofp %5 : vector<8x32xi32> to vector<8x32xf32>
    %7 = vector.extract_strided_slice %0 {offsets = [0, 1], sizes = [8, 1], strides = [1, 1]} : vector<8x4xi32> to vector<8x1xi32>
    %8 = vector.broadcast %7 : vector<8x1xi32> to vector<8x32xi32>
    %9 = arith.cmpi eq, %8, %1 : vector<8x32xi32>
    %10 = arith.extui %9 : vector<8x32xi1> to vector<8x32xi32>
    %11 = arith.sitofp %10 : vector<8x32xi32> to vector<8x32xf32>
    %12 = vector.extract_strided_slice %0 {offsets = [0, 2], sizes = [8, 1], strides = [1, 1]} : vector<8x4xi32> to vector<8x1xi32>
    %13 = vector.broadcast %12 : vector<8x1xi32> to vector<8x32xi32>
    %14 = arith.cmpi eq, %13, %1 : vector<8x32xi32>
    %15 = arith.extui %14 : vector<8x32xi1> to vector<8x32xi32>
    %16 = arith.sitofp %15 : vector<8x32xi32> to vector<8x32xf32>
    %17 = vector.extract_strided_slice %0 {offsets = [0, 3], sizes = [8, 1], strides = [1, 1]} : vector<8x4xi32> to vector<8x1xi32>
    %18 = vector.broadcast %17 : vector<8x1xi32> to vector<8x32xi32>
    %19 = arith.cmpi eq, %18, %1 : vector<8x32xi32>
    %20 = arith.extui %19 : vector<8x32xi1> to vector<8x32xi32>
    %21 = arith.sitofp %20 : vector<8x32xi32> to vector<8x32xf32>
    %22 = tpu.concatenate %6, %11, %16, %21 in 1 : vector<8x32xf32>, vector<8x32xf32>, vector<8x32xf32>, vector<8x32xf32> -> vector<8x128xf32>
    %c0_1 = arith.constant 0 : index
    %c0_2 = arith.constant 0 : index
    %23 = vector.load %arg2[%c0_1, %c0_2] : memref<128x128xf32, #tpu.memory_space<vmem>>, vector<128x128xf32>
    %cst = arith.constant dense<0.000000e+00> : vector<8x128xf32>
    %24 = tpu.matmul %22, %23, %cst {dimension_numbers = #tpu.dot_dimension_numbers<[1], [0], [0], [1], [0, 0, 1, 1], [], []>, precision = #tpu.contract_precision<fp32>} : vector<8x128xf32>, vector<128x128xf32>, vector<8x128xf32> -> vector<8x128xf32>
    %c0_3 = arith.constant 0 : index
    %c0_4 = arith.constant 0 : index
    %25 = vector.load %arg3[%c0_3, %c0_4] : memref<8x128xf32, #tpu.memory_space<vmem>>, vector<8x128xf32>
    tpu.vector_store %arg3[%c0_3, %c0_4], %24 {strides = array<i32>} : memref<8x128xf32, #tpu.memory_space<vmem>>, vector<8x128xf32>,
    return
  }
  func.func @transform_0(%arg0: i32) -> (i32, i32) {
    %c0_i32 = arith.constant 0 : i32
    %c0_i32_0 = arith.constant 0 : i32
    return %arg0, %c0_i32 : i32, i32
  }
  func.func @transform_1(%arg0: i32) -> (i32, i32) {
    %c0_i32 = arith.constant 0 : i32
    %c0_i32_0 = arith.constant 0 : i32
    %c0_i32_1 = arith.constant 0 : i32
    return %c0_i32, %c0_i32_0 : i32, i32
  }
  func.func @transform_2(%arg0: i32) -> (i32, i32) {
    %c0_i32 = arith.constant 0 : i32
    %c0_i32_0 = arith.constant 0 : i32
    return %arg0, %c0_i32 : i32, i32
  }
}

</mosaic_0001>

<llo_original>
// kernel: tpu_custom_call.1
$region0: #{tpu_custom_call.1}
  #allocation0 [shape = 'u32[]', space=smem, size = 0x4, offset = 0x4, fixed_abs, tag = 'smem constant byte address 0x4 - core index']
  #allocation1 [shape = 'u32[144,128]{1,0:T(1,128)}', space=vmem, size = 0x12000, scoped, tag = 'internal scratch']
  %s0 = inlined_call_operand.vmem [shape: s32[8,4], index: 0, kind: input, shape index: {}]
  %s1 = inlined_call_operand.hbm [shape: f32[128,128], index: 1, kind: input, shape index: {}]
  %s2 = inlined_call_operand.hbm [shape: f32[8,128], index: 2, kind: output, shape index: {}]
  %s3 = sld [smem:[#allocation0]]
  $region22: #{tpu_custom_call.1} parent=0
    _
  %s5 = ssub.s32 1, %s3
  %s6 = scalar_select 0, %s5, %s3
  $region1: #{tpu_custom_call.1} parent=0
    #allocation2 [shape = 'u8[65536]{0}', space=vmem, size = 0x10000, scoped, tag = 'input window, operand 1, single buffered']
    #allocation3 [shape = 's32[1]{0}', space=sflag, size = 0x4, scoped, tag = 'scoped memory for tpu_custom_call.1']
    #allocation4 [shape = 's32[1]{0}', space=sflag, size = 0x4, scoped, tag = 'scoped memory for tpu_custom_call.1']
    #allocation5 [shape = 'u8[4096]{0}', space=vmem, size = 0x1000, scoped, tag = 'output window, operand 0, single buffered']
    %7 = vsyncpa [#allocation3], 0
    %8 = vsyncpa [#allocation4], 0
    // Predicated region
    $region2: #{tpu_custom_call.1} parent=1 // pred_check
      _
    $region3: #{tpu_custom_call.1} parent=1 // pred_check_branch
      %10 = sbr.rel (0) target = $region5
    $region4: #{tpu_custom_call.1} parent=1 // pred_region
      _
    $region5: #{tpu_custom_call.1} parent=1 // pred_fallthru
      _
    // Predicated region
    $region6: #{tpu_custom_call.1} parent=1 // pred_check
      _
    $region7: #{tpu_custom_call.1} parent=1 // pred_check_branch
      %12 = sbr.rel (0) target = $region9
    $region8: #{tpu_custom_call.1} parent=1 // pred_region
      %s14 = ssub.s32 2048, 2048
      %15 = vsyncadd [#allocation3], %s14
      %s16 = sshll.u32 [#allocation2], 4
      %s17 = int_to_ptr.vmem [resolvable:$true] %s16
      %22 = dma.hbm_to_vmem [thread:$0]  %s1, 2048, %s17, [#allocation3], 128, 128, 8
    $region9: #{tpu_custom_call.1} parent=1 // pred_fallthru
      _
    // Predicated region
    $region10: #{tpu_custom_call.1} parent=1 // pred_check
      _
    $region11: #{tpu_custom_call.1} parent=1 // pred_check_branch
      %24 = sbr.rel (0) target = $region13
    $region12: #{tpu_custom_call.1} parent=1 // pred_region
      %25 = dma.done [#allocation3], 2048
    $region13: #{tpu_custom_call.1} parent=1 // pred_fallthru
      _
    %v26 = vld [vmem:[%s0] sm:$0xff]
    %v27 = vlaneseq
    %v28 = vand.u32 %v27, 127
    %29 = vset.pattern.permute.xlu0 0
    %30 = vperm.xlu0 %29, %v26
    %v31 = vpop.permute.xlu0 %30
    %vm32 = vcmp.eq.s32.totalorder %v31, %v28
    %v33 = vsel %vm32, 1, 0
    %v34 = vcvt.s32.f32 %v33
    %35 = vset.pattern.permute.xlu0 1
    %36 = vperm.xlu0 %35, %v26
    %v37 = vpop.permute.xlu0 %36
    %vm38 = vcmp.eq.s32.totalorder %v37, %v28
    %v39 = vsel %vm38, 1, 0
    %v40 = vcvt.s32.f32 %v39
    %41 = vset.pattern.permute.xlu0 2
    %42 = vperm.xlu0 %41, %v26
    %v43 = vpop.permute.xlu0 %42
    %vm44 = vcmp.eq.s32.totalorder %v43, %v28
    %v45 = vsel %vm44, 1, 0
    %v46 = vcvt.s32.f32 %v45
    %47 = vset.pattern.permute.xlu0 3
    %48 = vperm.xlu0 %47, %v26
    %v49 = vpop.permute.xlu0 %48
    %vm50 = vcmp.eq.s32.totalorder %v49, %v28
    %v51 = vsel %vm50, 1, 0
    %v52 = vcvt.s32.f32 %v51
    %54 = vrot.lane.b32.xlu0 %v40, 32
    %v55 = vpop.permute.xlu0 %54
    %58 = vrot.lane.b32.xlu0 %v46, 64
    %v59 = vpop.permute.xlu0 %58
    %62 = vrot.lane.b32.xlu0 %v52, 96
    %v63 = vpop.permute.xlu0 %62
    %vm65 = vcmask 261120
    %v66 = vsel %vm65, %v34, %v55
    %vm67 = vcmask 523264
    %v68 = vsel %vm67, %v66, %v59
    %vm69 = vcmask 785408
    %v70 = vsel %vm69, %v68, %v63
    %v71 = vld [vmem:[#allocation2] sm:$0xff]
    %v72 = vld [vmem:[#allocation2 + $0x8] sm:$0xff]
    %v73 = vld [vmem:[#allocation2 + $0x10] sm:$0xff]
    %v74 = vld [vmem:[#allocation2 + $0x18] sm:$0xff]
    %v75 = vld [vmem:[#allocation2 + $0x20] sm:$0xff]
    %v76 = vld [vmem:[#allocation2 + $0x28] sm:$0xff]
    %v77 = vld [vmem:[#allocation2 + $0x30] sm:$0xff]
    %v78 = vld [vmem:[#allocation2 + $0x38] sm:$0xff]
    %v79 = vld [vmem:[#allocation2 + $0x40] sm:$0xff]
    %v80 = vld [vmem:[#allocation2 + $0x48] sm:$0xff]
    %v81 = vld [vmem:[#allocation2 + $0x50] sm:$0xff]
    %v82 = vld [vmem:[#allocation2 + $0x58] sm:$0xff]
    %v83 = vld [vmem:[#allocation2 + $0x60] sm:$0xff]
    %v84 = vld [vmem:[#allocation2 + $0x68] sm:$0xff]
    %v85 = vld [vmem:[#allocation2 + $0x70] sm:$0xff]
    %v86 = vld [vmem:[#allocation2 + $0x78] sm:$0xff]
    %87 = vmatprep.subr.mxu0 0.0
    %v88 = vand.u32 %v71, 4294901760
    %89 = vmatpush1.msra.mxu0 %v88
    %90 = vmatprep.subr.mxu0 0.0
    %v91 = vand.u32 %v72, 4294901760
    %92 = vmatpush1.msra.mxu0 %v91
    %93 = vmatprep.subr.mxu0 0.0
    %v94 = vand.u32 %v73, 4294901760
    %95 = vmatpush1.msra.mxu0 %v94
    %96 = vmatprep.subr.mxu0 0.0
    %v97 = vand.u32 %v74, 4294901760
    %98 = vmatpush1.msra.mxu0 %v97
    %99 = vmatprep.subr.mxu0 0.0
    %v100 = vand.u32 %v75, 4294901760
    %101 = vmatpush1.msra.mxu0 %v100
    %102 = vmatprep.subr.mxu0 0.0
    %v103 = vand.u32 %v76, 4294901760
    %104 = vmatpush1.msra.mxu0 %v103
    %105 = vmatprep.subr.mxu0 0.0
    %v106 = vand.u32 %v77, 4294901760
    %107 = vmatpush1.msra.mxu0 %v106
    %108 = vmatprep.subr.mxu0 0.0
    %v109 = vand.u32 %v78, 4294901760
    %110 = vmatpush1.msra.mxu0 %v109
    %111 = vmatprep.subr.mxu0 0.0
    %v112 = vand.u32 %v79, 4294901760
    %113 = vmatpush1.msra.mxu0 %v112
    %114 = vmatprep.subr.mxu0 0.0
    %v115 = vand.u32 %v80, 4294901760
    %116 = vmatpush1.msra.mxu0 %v115
    %117 = vmatprep.subr.mxu0 0.0
    %v118 = vand.u32 %v81, 4294901760
    %119 = vmatpush1.msra.mxu0 %v118
    %120 = vmatprep.subr.mxu0 0.0
    %v121 = vand.u32 %v82, 4294901760
    %122 = vmatpush1.msra.mxu0 %v121
    %123 = vmatprep.subr.mxu0 0.0
    %v124 = vand.u32 %v83, 4294901760
    %125 = vmatpush1.msra.mxu0 %v124
    %126 = vmatprep.subr.mxu0 0.0
    %v127 = vand.u32 %v84, 4294901760
    %128 = vmatpush1.msra.mxu0 %v127
    %129 = vmatprep.subr.mxu0 0.0
    %v130 = vand.u32 %v85, 4294901760
    %131 = vmatpush1.msra.mxu0 %v130
    %132 = vmatprep.subr.mxu0 0.0
    %v133 = vand.u32 %v86, 4294901760
    %134 = vmatpush1.msra.mxu0 %v133
    %135 = vmatprep.subr.mxu0 0.0
    %136 = vmatpush1.msra.mxu0 0.0
    %137 = vmatprep.subr.mxu0 0.0
    %138 = vmatpush1.msra.mxu0 0.0
    %139 = vmatprep.subr.mxu0 0.0
    %140 = vmatpush1.msra.mxu0 0.0
    %141 = vmatprep.subr.mxu0 0.0
    %142 = vmatpush1.msra.mxu0 0.0
    %143 = vmatprep.subr.mxu0 0.0
    %144 = vmatpush1.msra.mxu0 0.0
    %145 = vmatprep.subr.mxu0 0.0
    %146 = vmatpush1.msra.mxu0 0.0
    %147 = vmatprep.subr.mxu0 0.0
    %148 = vmatpush1.msra.mxu0 0.0
    %149 = vmatprep.subr.mxu0 0.0
    %150 = vmatpush1.msra.mxu0 0.0
    %151 = vmatprep.subr.mxu0 0.0
    %152 = vmatpush1.msra.mxu0 0.0
    %153 = vmatprep.subr.mxu0 0.0
    %154 = vmatpush1.msra.mxu0 0.0
    %155 = vmatprep.subr.mxu0 0.0
    %156 = vmatpush1.msra.mxu0 0.0
    %157 = vmatprep.subr.mxu0 0.0
    %158 = vmatpush1.msra.mxu0 0.0
    %159 = vmatprep.subr.mxu0 0.0
    %160 = vmatpush1.msra.mxu0 0.0
    %161 = vmatprep.subr.mxu0 0.0
    %162 = vmatpush1.msra.mxu0 0.0
    %163 = vmatprep.subr.mxu0 0.0
    %164 = vmatpush1.msra.mxu0 0.0
    %165 = vmatprep.subr.mxu0 0.0
    %166 = vmatpush1.msra.mxu0 0.0
    %167 = vmatprep.mubr.f32.mxu0 0.0
    %v168 = vand.u32 %v70, 4294901760
    %v169 = vsub.f32 %v70, %v168
    %v170 = vand.u32 %v169, 4294901760
    %v171 = vsub.f32 %v169, %v170
    %v172 = vand.u32 %v171, 4294901760
    %173 = vmatmul.mubr.f32.gmra.mrb[0].mxu0 %v172
    %v174 = vpop.f32.mrb[0].mxu0
    %v175 = vadd.f32 0.0, %v174
    %v176 = vpop.f32.mrb[0].mxu0
    %177 = vdwg.mxu0
    %178 = vmatprep.subr.mxu0 0.0
    %v179 = vand.u32 %v71, 4294901760
    %v180 = vsub.f32 %v71, %v179
    %v181 = vand.u32 %v180, 4294901760
    %v182 = vsub.f32 %v180, %v181
    %v183 = vand.u32 %v182, 4294901760
    %184 = vmatpush1.msra.mxu0 %v183
    %185 = vmatprep.subr.mxu0 0.0
    %v186 = vand.u32 %v72, 4294901760
    %v187 = vsub.f32 %v72, %v186
    %v188 = vand.u32 %v187, 4294901760
    %v189 = vsub.f32 %v187, %v188
    %v190 = vand.u32 %v189, 4294901760
    %191 = vmatpush1.msra.mxu0 %v190
    %192 = vmatprep.subr.mxu0 0.0
    %v193 = vand.u32 %v73, 4294901760
    %v194 = vsub.f32 %v73, %v193
    %v195 = vand.u32 %v194, 4294901760
    %v196 = vsub.f32 %v194, %v195
    %v197 = vand.u32 %v196, 4294901760
    %198 = vmatpush1.msra.mxu0 %v197
    %199 = vmatprep.subr.mxu0 0.0
    %v200 = vand.u32 %v74, 4294901760
    %v201 = vsub.f32 %v74, %v200
    %v202 = vand.u32 %v201, 4294901760
    %v203 = vsub.f32 %v201, %v202
    %v204 = vand.u32 %v203, 4294901760
    %205 = vmatpush1.msra.mxu0 %v204
    %206 = vmatprep.subr.mxu0 0.0
    %v207 = vand.u32 %v75, 4294901760
    %v208 = vsub.f32 %v75, %v207
    %v209 = vand.u32 %v208, 4294901760
    %v210 = vsub.f32 %v208, %v209
    %v211 = vand.u32 %v210, 4294901760
    %212 = vmatpush1.msra.mxu0 %v211
    %213 = vmatprep.subr.mxu0 0.0
    %v214 = vand.u32 %v76, 4294901760
    %v215 = vsub.f32 %v76, %v214
    %v216 = vand.u32 %v215, 4294901760
    %v217 = vsub.f32 %v215, %v216
    %v218 = vand.u32 %v217, 4294901760
    %219 = vmatpush1.msra.mxu0 %v218
    %220 = vmatprep.subr.mxu0 0.0
    %v221 = vand.u32 %v77, 4294901760
    %v222 = vsub.f32 %v77, %v221
    %v223 = vand.u32 %v222, 4294901760
    %v224 = vsub.f32 %v222, %v223
    %v225 = vand.u32 %v224, 4294901760
    %226 = vmatpush1.msra.mxu0 %v225
    %227 = vmatprep.subr.mxu0 0.0
    %v228 = vand.u32 %v78, 4294901760
    %v229 = vsub.f32 %v78, %v228
    %v230 = vand.u32 %v229, 4294901760
    %v231 = vsub.f32 %v229, %v230
    %v232 = vand.u32 %v231, 4294901760
    %233 = vmatpush1.msra.mxu0 %v232
    %234 = vmatprep.subr.mxu0 0.0
    %v235 = vand.u32 %v79, 4294901760
    %v236 = vsub.f32 %v79, %v235
    %v237 = vand.u32 %v236, 4294901760
    %v238 = vsub.f32 %v236, %v237
    %v239 = vand.u32 %v238, 4294901760
    %240 = vmatpush1.msra.mxu0 %v239
    %241 = vmatprep.subr.mxu0 0.0
    %v242 = vand.u32 %v80, 4294901760
    %v243 = vsub.f32 %v80, %v242
    %v244 = vand.u32 %v243, 4294901760
    %v245 = vsub.f32 %v243, %v244
    %v246 = vand.u32 %v245, 4294901760
    %247 = vmatpush1.msra.mxu0 %v246
    %248 = vmatprep.subr.mxu0 0.0
    %v249 = vand.u32 %v81, 4294901760
    %v250 = vsub.f32 %v81, %v249
    %v251 = vand.u32 %v250, 4294901760
    %v252 = vsub.f32 %v250, %v251
    %v253 = vand.u32 %v252, 4294901760
    %254 = vmatpush1.msra.mxu0 %v253
    %255 = vmatprep.subr.mxu0 0.0
    %v256 = vand.u32 %v82, 4294901760
    %v257 = vsub.f32 %v82, %v256
    %v258 = vand.u32 %v257, 4294901760
    %v259 = vsub.f32 %v257, %v258
    %v260 = vand.u32 %v259, 4294901760
    %261 = vmatpush1.msra.mxu0 %v260
    %262 = vmatprep.subr.mxu0 0.0
    %v263 = vand.u32 %v83, 4294901760
    %v264 = vsub.f32 %v83, %v263
    %v265 = vand.u32 %v264, 4294901760
    %v266 = vsub.f32 %v264, %v265
    %v267 = vand.u32 %v266, 4294901760
    %268 = vmatpush1.msra.mxu0 %v267
    %269 = vmatprep.subr.mxu0 0.0
    %v270 = vand.u32 %v84, 4294901760
    %v271 = vsub.f32 %v84, %v270
    %v272 = vand.u32 %v271, 4294901760
    %v273 = vsub.f32 %v271, %v272
    %v274 = vand.u32 %v273, 4294901760
    %275 = vmatpush1.msra.mxu0 %v274
    %276 = vmatprep.subr.mxu0 0.0
    %v277 = vand.u32 %v85, 4294901760
    %v278 = vsub.f32 %v85, %v277
    %v279 = vand.u32 %v278, 4294901760
    %v280 = vsub.f32 %v278, %v279
    %v281 = vand.u32 %v280, 4294901760
    %282 = vmatpush1.msra.mxu0 %v281
    %283 = vmatprep.subr.mxu0 0.0
    %v284 = vand.u32 %v86, 4294901760
    %v285 = vsub.f32 %v86, %v284
    %v286 = vand.u32 %v285, 4294901760
    %v287 = vsub.f32 %v285, %v286
    %v288 = vand.u32 %v287, 4294901760
    %289 = vmatpush1.msra.mxu0 %v288
    %290 = vmatprep.subr.mxu0 0.0
    %291 = vmatpush1.msra.mxu0 0.0
    %292 = vmatprep.subr.mxu0 0.0
    %293 = vmatpush1.msra.mxu0 0.0
    %294 = vmatprep.subr.mxu0 0.0
    %295 = vmatpush1.msra.mxu0 0.0
    %296 = vmatprep.subr.mxu0 0.0
    %297 = vmatpush1.msra.mxu0 0.0
    %298 = vmatprep.subr.mxu0 0.0
    %299 = vmatpush1.msra.mxu0 0.0
    %300 = vmatprep.subr.mxu0 0.0
    %301 = vmatpush1.msra.mxu0 0.0
    %302 = vmatprep.subr.mxu0 0.0
    %303 = vmatpush1.msra.mxu0 0.0
    %304 = vmatprep.subr.mxu0 0.0
    %305 = vmatpush1.msra.mxu0 0.0
    %306 = vmatprep.subr.mxu0 0.0
    %307 = vmatpush1.msra.mxu0 0.0
    %308 = vmatprep.subr.mxu0 0.0
    %309 = vmatpush1.msra.mxu0 0.0
    %310 = vmatprep.subr.mxu0 0.0
    %311 = vmatpush1.msra.mxu0 0.0
    %312 = vmatprep.subr.mxu0 0.0
    %313 = vmatpush1.msra.mxu0 0.0
    %314 = vmatprep.subr.mxu0 0.0
    %315 = vmatpush1.msra.mxu0 0.0
    %316 = vmatprep.subr.mxu0 0.0
    %317 = vmatpush1.msra.mxu0 0.0
    %318 = vmatprep.subr.mxu0 0.0
    %319 = vmatpush1.msra.mxu0 0.0
    %320 = vmatprep.subr.mxu0 0.0
    %321 = vmatpush1.msra.mxu0 0.0
    %322 = vmatprep.mubr.f32.mxu0 0.0
    %v323 = vand.u32 %v70, 4294901760
    %324 = vmatmul.mubr.f32.gmra.mrb[0].mxu0 %v323
    %v325 = vpop.f32.mrb[0].mxu0
    %v326 = vadd.f32 %v175, %v325
    %v327 = vpop.f32.mrb[0].mxu0
    %328 = vdwg.mxu0
    %329 = vmatprep.subr.mxu0 0.0
    %v330 = vand.u32 %v71, 4294901760
    %v331 = vsub.f32 %v71, %v330
    %332 = vmatpush1.msra.mxu0 %v331
    %333 = vmatprep.subr.mxu0 0.0
    %v334 = vand.u32 %v72, 4294901760
    %v335 = vsub.f32 %v72, %v334
    %336 = vmatpush1.msra.mxu0 %v335
    %337 = vmatprep.subr.mxu0 0.0
    %v338 = vand.u32 %v73, 4294901760
    %v339 = vsub.f32 %v73, %v338
    %340 = vmatpush1.msra.mxu0 %v339
    %341 = vmatprep.subr.mxu0 0.0
    %v342 = vand.u32 %v74, 4294901760
    %v343 = vsub.f32 %v74, %v342
    %344 = vmatpush1.msra.mxu0 %v343
    %345 = vmatprep.subr.mxu0 0.0
    %v346 = vand.u32 %v75, 4294901760
    %v347 = vsub.f32 %v75, %v346
    %348 = vmatpush1.msra.mxu0 %v347
    %349 = vmatprep.subr.mxu0 0.0
    %v350 = vand.u32 %v76, 4294901760
    %v351 = vsub.f32 %v76, %v350
    %352 = vmatpush1.msra.mxu0 %v351
    %353 = vmatprep.subr.mxu0 0.0
    %v354 = vand.u32 %v77, 4294901760
    %v355 = vsub.f32 %v77, %v354
    %356 = vmatpush1.msra.mxu0 %v355
    %357 = vmatprep.subr.mxu0 0.0
    %v358 = vand.u32 %v78, 4294901760
    %v359 = vsub.f32 %v78, %v358
    %360 = vmatpush1.msra.mxu0 %v359
    %361 = vmatprep.subr.mxu0 0.0
    %v362 = vand.u32 %v79, 4294901760
    %v363 = vsub.f32 %v79, %v362
    %364 = vmatpush1.msra.mxu0 %v363
    %365 = vmatprep.subr.mxu0 0.0
    %v366 = vand.u32 %v80, 4294901760
    %v367 = vsub.f32 %v80, %v366
    %368 = vmatpush1.msra.mxu0 %v367
    %369 = vmatprep.subr.mxu0 0.0
    %v370 = vand.u32 %v81, 4294901760
    %v371 = vsub.f32 %v81, %v370
    %372 = vmatpush1.msra.mxu0 %v371
    %373 = vmatprep.subr.mxu0 0.0
    %v374 = vand.u32 %v82, 4294901760
    %v375 = vsub.f32 %v82, %v374
    %376 = vmatpush1.msra.mxu0 %v375
    %377 = vmatprep.subr.mxu0 0.0
    %v378 = vand.u32 %v83, 4294901760
    %v379 = vsub.f32 %v83, %v378
    %380 = vmatpush1.msra.mxu0 %v379
    %381 = vmatprep.subr.mxu0 0.0
    %v382 = vand.u32 %v84, 4294901760
    %v383 = vsub.f32 %v84, %v382
    %384 = vmatpush1.msra.mxu0 %v383
    %385 = vmatprep.subr.mxu0 0.0
    %v386 = vand.u32 %v85, 4294901760
    %v387 = vsub.f32 %v85, %v386
    %388 = vmatpush1.msra.mxu0 %v387
    %389 = vmatprep.subr.mxu0 0.0
    %v390 = vand.u32 %v86, 4294901760
    %v391 = vsub.f32 %v86, %v390
    %392 = vmatpush1.msra.mxu0 %v391
    %393 = vmatprep.subr.mxu0 0.0
    %394 = vmatpush1.msra.mxu0 0.0
    %395 = vmatprep.subr.mxu0 0.0
    %396 = vmatpush1.msra.mxu0 0.0
    %397 = vmatprep.subr.mxu0 0.0
    %398 = vmatpush1.msra.mxu0 0.0
    %399 = vmatprep.subr.mxu0 0.0
    %400 = vmatpush1.msra.mxu0 0.0
    %401 = vmatprep.subr.mxu0 0.0
    %402 = vmatpush1.msra.mxu0 0.0
    %403 = vmatprep.subr.mxu0 0.0
    %404 = vmatpush1.msra.mxu0 0.0
    %405 = vmatprep.subr.mxu0 0.0
    %406 = vmatpush1.msra.mxu0 0.0
    %407 = vmatprep.subr.mxu0 0.0
    %408 = vmatpush1.msra.mxu0 0.0
    %409 = vmatprep.subr.mxu0 0.0
    %410 = vmatpush1.msra.mxu0 0.0
    %411 = vmatprep.subr.mxu0 0.0
    %412 = vmatpush1.msra.mxu0 0.0
    %413 = vmatprep.subr.mxu0 0.0
    %414 = vmatpush1.msra.mxu0 0.0
    %415 = vmatprep.subr.mxu0 0.0
    %416 = vmatpush1.msra.mxu0 0.0
    %417 = vmatprep.subr.mxu0 0.0
    %418 = vmatpush1.msra.mxu0 0.0
    %419 = vmatprep.subr.mxu0 0.0
    %420 = vmatpush1.msra.mxu0 0.0
    %421 = vmatprep.subr.mxu0 0.0
    %422 = vmatpush1.msra.mxu0 0.0
    %423 = vmatprep.subr.mxu0 0.0
    %424 = vmatpush1.msra.mxu0 0.0
    %425 = vmatprep.mubr.f32.mxu0 0.0
    %v426 = vand.u32 %v70, 4294901760
    %v427 = vsub.f32 %v70, %v426
    %428 = vmatmul.mubr.f32.gmra.mrb[0].mxu0 %v427
    %v429 = vpop.f32.mrb[0].mxu0
    %v430 = vadd.f32 %v326, %v429
    %v431 = vpop.f32.mrb[0].mxu0
    %432 = vdwg.mxu0
    %433 = vmatprep.subr.mxu0 0.0
    %v434 = vand.u32 %v71, 4294901760
    %435 = vmatpush1.msra.mxu0 %v434
    %436 = vmatprep.subr.mxu0 0.0
    %v437 = vand.u32 %v72, 4294901760
    %438 = vmatpush1.msra.mxu0 %v437
    %439 = vmatprep.subr.mxu0 0.0
    %v440 = vand.u32 %v73, 4294901760
    %441 = vmatpush1.msra.mxu0 %v440
    %442 = vmatprep.subr.mxu0 0.0
    %v443 = vand.u32 %v74, 4294901760
    %444 = vmatpush1.msra.mxu0 %v443
    %445 = vmatprep.subr.mxu0 0.0
    %v446 = vand.u32 %v75, 4294901760
    %447 = vmatpush1.msra.mxu0 %v446
    %448 = vmatprep.subr.mxu0 0.0
    %v449 = vand.u32 %v76, 4294901760
    %450 = vmatpush1.msra.mxu0 %v449
    %451 = vmatprep.subr.mxu0 0.0
    %v452 = vand.u32 %v77, 4294901760
    %453 = vmatpush1.msra.mxu0 %v452
    %454 = vmatprep.subr.mxu0 0.0
    %v455 = vand.u32 %v78, 4294901760
    %456 = vmatpush1.msra.mxu0 %v455
    %457 = vmatprep.subr.mxu0 0.0
    %v458 = vand.u32 %v79, 4294901760
    %459 = vmatpush1.msra.mxu0 %v458
    %460 = vmatprep.subr.mxu0 0.0
    %v461 = vand.u32 %v80, 4294901760
    %462 = vmatpush1.msra.mxu0 %v461
    %463 = vmatprep.subr.mxu0 0.0
    %v464 = vand.u32 %v81, 4294901760
    %465 = vmatpush1.msra.mxu0 %v464
    %466 = vmatprep.subr.mxu0 0.0
    %v467 = vand.u32 %v82, 4294901760
    %468 = vmatpush1.msra.mxu0 %v467
    %469 = vmatprep.subr.mxu0 0.0
    %v470 = vand.u32 %v83, 4294901760
    %471 = vmatpush1.msra.mxu0 %v470
    %472 = vmatprep.subr.mxu0 0.0
    %v473 = vand.u32 %v84, 4294901760
    %474 = vmatpush1.msra.mxu0 %v473
    %475 = vmatprep.subr.mxu0 0.0
    %v476 = vand.u32 %v85, 4294901760
    %477 = vmatpush1.msra.mxu0 %v476
    %478 = vmatprep.subr.mxu0 0.0
    %v479 = vand.u32 %v86, 4294901760
    %480 = vmatpush1.msra.mxu0 %v479
    %481 = vmatprep.subr.mxu0 0.0
    %482 = vmatpush1.msra.mxu0 0.0
    %483 = vmatprep.subr.mxu0 0.0
    %484 = vmatpush1.msra.mxu0 0.0
    %485 = vmatprep.subr.mxu0 0.0
    %486 = vmatpush1.msra.mxu0 0.0
    %487 = vmatprep.subr.mxu0 0.0
    %488 = vmatpush1.msra.mxu0 0.0
    %489 = vmatprep.subr.mxu0 0.0
    %490 = vmatpush1.msra.mxu0 0.0
    %491 = vmatprep.subr.mxu0 0.0
    %492 = vmatpush1.msra.mxu0 0.0
    %493 = vmatprep.subr.mxu0 0.0
    %494 = vmatpush1.msra.mxu0 0.0
    %495 = vmatprep.subr.mxu0 0.0
    %496 = vmatpush1.msra.mxu0 0.0
    %497 = vmatprep.subr.mxu0 0.0
    %498 = vmatpush1.msra.mxu0 0.0
    %499 = vmatprep.subr.mxu0 0.0
    %500 = vmatpush1.msra.mxu0 0.0
    %501 = vmatprep.subr.mxu0 0.0
    %502 = vmatpush1.msra.mxu0 0.0
    %503 = vmatprep.subr.mxu0 0.0
    %504 = vmatpush1.msra.mxu0 0.0
    %505 = vmatprep.subr.mxu0 0.0
    %506 = vmatpush1.msra.mxu0 0.0
    %507 = vmatprep.subr.mxu0 0.0
    %508 = vmatpush1.msra.mxu0 0.0
    %509 = vmatprep.subr.mxu0 0.0
    %510 = vmatpush1.msra.mxu0 0.0
    %511 = vmatprep.subr.mxu0 0.0
    %512 = vmatpush1.msra.mxu0 0.0
    %513 = vmatprep.mubr.f32.mxu0 0.0
    %v514 = vand.u32 %v70, 4294901760
    %v515 = vsub.f32 %v70, %v514
    %v516 = vand.u32 %v515, 4294901760
    %517 = vmatmul.mubr.f32.gmra.mrb[0].mxu0 %v516
    %v518 = vpop.f32.mrb[0].mxu0
    %v519 = vadd.f32 %v430, %v518
    %v520 = vpop.f32.mrb[0].mxu0
    %521 = vdwg.mxu0
    %522 = vmatprep.subr.mxu0 0.0
    %v523 = vand.u32 %v71, 4294901760
    %v524 = vsub.f32 %v71, %v523
    %v525 = vand.u32 %v524, 4294901760
    %526 = vmatpush1.msra.mxu0 %v525
    %527 = vmatprep.subr.mxu0 0.0
    %v528 = vand.u32 %v72, 4294901760
    %v529 = vsub.f32 %v72, %v528
    %v530 = vand.u32 %v529, 4294901760
    %531 = vmatpush1.msra.mxu0 %v530
    %532 = vmatprep.subr.mxu0 0.0
    %v533 = vand.u32 %v73, 4294901760
    %v534 = vsub.f32 %v73, %v533
    %v535 = vand.u32 %v534, 4294901760
    %536 = vmatpush1.msra.mxu0 %v535
    %537 = vmatprep.subr.mxu0 0.0
    %v538 = vand.u32 %v74, 4294901760
    %v539 = vsub.f32 %v74, %v538
    %v540 = vand.u32 %v539, 4294901760
    %541 = vmatpush1.msra.mxu0 %v540
    %542 = vmatprep.subr.mxu0 0.0
    %v543 = vand.u32 %v75, 4294901760
    %v544 = vsub.f32 %v75, %v543
    %v545 = vand.u32 %v544, 4294901760
    %546 = vmatpush1.msra.mxu0 %v545
    %547 = vmatprep.subr.mxu0 0.0
    %v548 = vand.u32 %v76, 4294901760
    %v549 = vsub.f32 %v76, %v548
    %v550 = vand.u32 %v549, 4294901760
    %551 = vmatpush1.msra.mxu0 %v550
    %552 = vmatprep.subr.mxu0 0.0
    %v553 = vand.u32 %v77, 4294901760
    %v554 = vsub.f32 %v77, %v553
    %v555 = vand.u32 %v554, 4294901760
    %556 = vmatpush1.msra.mxu0 %v555
    %557 = vmatprep.subr.mxu0 0.0
    %v558 = vand.u32 %v78, 4294901760
    %v559 = vsub.f32 %v78, %v558
    %v560 = vand.u32 %v559, 4294901760
    %561 = vmatpush1.msra.mxu0 %v560
    %562 = vmatprep.subr.mxu0 0.0
    %v563 = vand.u32 %v79, 4294901760
    %v564 = vsub.f32 %v79, %v563
    %v565 = vand.u32 %v564, 4294901760
    %566 = vmatpush1.msra.mxu0 %v565
    %567 = vmatprep.subr.mxu0 0.0
    %v568 = vand.u32 %v80, 4294901760
    %v569 = vsub.f32 %v80, %v568
    %v570 = vand.u32 %v569, 4294901760
    %571 = vmatpush1.msra.mxu0 %v570
    %572 = vmatprep.subr.mxu0 0.0
    %v573 = vand.u32 %v81, 4294901760
    %v574 = vsub.f32 %v81, %v573
    %v575 = vand.u32 %v574, 4294901760
    %576 = vmatpush1.msra.mxu0 %v575
    %577 = vmatprep.subr.mxu0 0.0
    %v578 = vand.u32 %v82, 4294901760
    %v579 = vsub.f32 %v82, %v578
    %v580 = vand.u32 %v579, 4294901760
    %581 = vmatpush1.msra.mxu0 %v580
    %582 = vmatprep.subr.mxu0 0.0
    %v583 = vand.u32 %v83, 4294901760
    %v584 = vsub.f32 %v83, %v583
    %v585 = vand.u32 %v584, 4294901760
    %586 = vmatpush1.msra.mxu0 %v585
    %587 = vmatprep.subr.mxu0 0.0
    %v588 = vand.u32 %v84, 4294901760
    %v589 = vsub.f32 %v84, %v588
    %v590 = vand.u32 %v589, 4294901760
    %591 = vmatpush1.msra.mxu0 %v590
    %592 = vmatprep.subr.mxu0 0.0
    %v593 = vand.u32 %v85, 4294901760
    %v594 = vsub.f32 %v85, %v593
    %v595 = vand.u32 %v594, 4294901760
    %596 = vmatpush1.msra.mxu0 %v595
    %597 = vmatprep.subr.mxu0 0.0
    %v598 = vand.u32 %v86, 4294901760
    %v599 = vsub.f32 %v86, %v598
    %v600 = vand.u32 %v599, 4294901760
    %601 = vmatpush1.msra.mxu0 %v600
    %602 = vmatprep.subr.mxu0 0.0
    %603 = vmatpush1.msra.mxu0 0.0
    %604 = vmatprep.subr.mxu0 0.0
    %605 = vmatpush1.msra.mxu0 0.0
    %606 = vmatprep.subr.mxu0 0.0
    %607 = vmatpush1.msra.mxu0 0.0
    %608 = vmatprep.subr.mxu0 0.0
    %609 = vmatpush1.msra.mxu0 0.0
    %610 = vmatprep.subr.mxu0 0.0
    %611 = vmatpush1.msra.mxu0 0.0
    %612 = vmatprep.subr.mxu0 0.0
    %613 = vmatpush1.msra.mxu0 0.0
    %614 = vmatprep.subr.mxu0 0.0
    %615 = vmatpush1.msra.mxu0 0.0
    %616 = vmatprep.subr.mxu0 0.0
    %617 = vmatpush1.msra.mxu0 0.0
    %618 = vmatprep.subr.mxu0 0.0
    %619 = vmatpush1.msra.mxu0 0.0
    %620 = vmatprep.subr.mxu0 0.0
    %621 = vmatpush1.msra.mxu0 0.0
    %622 = vmatprep.subr.mxu0 0.0
    %623 = vmatpush1.msra.mxu0 0.0
    %624 = vmatprep.subr.mxu0 0.0
    %625 = vmatpush1.msra.mxu0 0.0
    %626 = vmatprep.subr.mxu0 0.0
    %627 = vmatpush1.msra.mxu0 0.0
    %628 = vmatprep.subr.mxu0 0.0
    %629 = vmatpush1.msra.mxu0 0.0
    %630 = vmatprep.subr.mxu0 0.0
    %631 = vmatpush1.msra.mxu0 0.0
    %632 = vmatprep.subr.mxu0 0.0
    %633 = vmatpush1.msra.mxu0 0.0
    %634 = vmatprep.mubr.f32.mxu0 0.0
    %v635 = vand.u32 %v70, 4294901760
    %636 = vmatmul.mubr.f32.gmra.mrb[0].mxu0 %v635
    %v637 = vpop.f32.mrb[0].mxu0
    %v638 = vadd.f32 %v519, %v637
    %v639 = vpop.f32.mrb[0].mxu0
    %640 = vdwg.mxu0
    %641 = vmatprep.subr.mxu0 0.0
    %v642 = vand.u32 %v71, 4294901760
    %643 = vmatpush1.msra.mxu0 %v642
    %644 = vmatprep.subr.mxu0 0.0
    %v645 = vand.u32 %v72, 4294901760
    %646 = vmatpush1.msra.mxu0 %v645
    %647 = vmatprep.subr.mxu0 0.0
    %v648 = vand.u32 %v73, 4294901760
    %649 = vmatpush1.msra.mxu0 %v648
    %650 = vmatprep.subr.mxu0 0.0
    %v651 = vand.u32 %v74, 4294901760
    %652 = vmatpush1.msra.mxu0 %v651
    %653 = vmatprep.subr.mxu0 0.0
    %v654 = vand.u32 %v75, 4294901760
    %655 = vmatpush1.msra.mxu0 %v654
    %656 = vmatprep.subr.mxu0 0.0
    %v657 = vand.u32 %v76, 4294901760
    %658 = vmatpush1.msra.mxu0 %v657
    %659 = vmatprep.subr.mxu0 0.0
    %v660 = vand.u32 %v77, 4294901760
    %661 = vmatpush1.msra.mxu0 %v660
    %662 = vmatprep.subr.mxu0 0.0
    %v663 = vand.u32 %v78, 4294901760
    %664 = vmatpush1.msra.mxu0 %v663
    %665 = vmatprep.subr.mxu0 0.0
    %v666 = vand.u32 %v79, 4294901760
    %667 = vmatpush1.msra.mxu0 %v666
    %668 = vmatprep.subr.mxu0 0.0
    %v669 = vand.u32 %v80, 4294901760
    %670 = vmatpush1.msra.mxu0 %v669
    %671 = vmatprep.subr.mxu0 0.0
    %v672 = vand.u32 %v81, 4294901760
    %673 = vmatpush1.msra.mxu0 %v672
    %674 = vmatprep.subr.mxu0 0.0
    %v675 = vand.u32 %v82, 4294901760
    %676 = vmatpush1.msra.mxu0 %v675
    %677 = vmatprep.subr.mxu0 0.0
    %v678 = vand.u32 %v83, 4294901760
    %679 = vmatpush1.msra.mxu0 %v678
    %680 = vmatprep.subr.mxu0 0.0
    %v681 = vand.u32 %v84, 4294901760
    %682 = vmatpush1.msra.mxu0 %v681
    %683 = vmatprep.subr.mxu0 0.0
    %v684 = vand.u32 %v85, 4294901760
    %685 = vmatpush1.msra.mxu0 %v684
    %686 = vmatprep.subr.mxu0 0.0
    %v687 = vand.u32 %v86, 4294901760
    %688 = vmatpush1.msra.mxu0 %v687
    %689 = vmatprep.subr.mxu0 0.0
    %690 = vmatpush1.msra.mxu0 0.0
    %691 = vmatprep.subr.mxu0 0.0
    %692 = vmatpush1.msra.mxu0 0.0
    %693 = vmatprep.subr.mxu0 0.0
    %694 = vmatpush1.msra.mxu0 0.0
    %695 = vmatprep.subr.mxu0 0.0
    %696 = vmatpush1.msra.mxu0 0.0
    %697 = vmatprep.subr.mxu0 0.0
    %698 = vmatpush1.msra.mxu0 0.0
    %699 = vmatprep.subr.mxu0 0.0
    %700 = vmatpush1.msra.mxu0 0.0
    %701 = vmatprep.subr.mxu0 0.0
    %702 = vmatpush1.msra.mxu0 0.0
    %703 = vmatprep.subr.mxu0 0.0
    %704 = vmatpush1.msra.mxu0 0.0
    %705 = vmatprep.subr.mxu0 0.0
    %706 = vmatpush1.msra.mxu0 0.0
    %707 = vmatprep.subr.mxu0 0.0
    %708 = vmatpush1.msra.mxu0 0.0
    %709 = vmatprep.subr.mxu0 0.0
    %710 = vmatpush1.msra.mxu0 0.0
    %711 = vmatprep.subr.mxu0 0.0
    %712 = vmatpush1.msra.mxu0 0.0
    %713 = vmatprep.subr.mxu0 0.0
    %714 = vmatpush1.msra.mxu0 0.0
    %715 = vmatprep.subr.mxu0 0.0
    %716 = vmatpush1.msra.mxu0 0.0
    %717 = vmatprep.subr.mxu0 0.0
    %718 = vmatpush1.msra.mxu0 0.0
    %719 = vmatprep.subr.mxu0 0.0
    %720 = vmatpush1.msra.mxu0 0.0
    %721 = vmatprep.mubr.f32.mxu0 0.0
    %v722 = vand.u32 %v70, 4294901760
    %723 = vmatmul.mubr.f32.gmra.mrb[0].mxu0 %v722
    %v724 = vpop.f32.mrb[0].mxu0
    %v725 = vadd.f32 %v638, %v724
    %v726 = vpop.f32.mrb[0].mxu0
    %727 = vdwg.mxu0
    %728 = vst [vmem:[#allocation5] sm:$0xff] %v725
    // Predicated region
    $region14: #{tpu_custom_call.1} parent=1 // pred_check
      _
    $region15: #{tpu_custom_call.1} parent=1 // pred_check_branch
      %730 = sbr.rel (0) target = $region17
    $region16: #{tpu_custom_call.1} parent=1 // pred_region
      %s732 = ssub.s32 128, 128
      %733 = vsyncadd [#allocation4], %s732
      %s735 = sshll.u32 [#allocation5], 4
      %s736 = int_to_ptr.vmem [resolvable:$true] %s735
      %738 = dma.vmem_to_hbm [thread:$0]  %s736, 128, %s2, [#allocation4]
    $region17: #{tpu_custom_call.1} parent=1 // pred_fallthru
      _
    // Predicated region
    $region18: #{tpu_custom_call.1} parent=1 // pred_check
      _
    $region19: #{tpu_custom_call.1} parent=1 // pred_check_branch
      %740 = sbr.rel (0) target = $region21
    $region20: #{tpu_custom_call.1} parent=1 // pred_region
      %741 = dma.done [#allocation4], 128
    $region21: #{tpu_custom_call.1} parent=1 // pred_fallthru
      _
    %742 = vsyncpa [#allocation3], 1
    %743 = vsyncpa [#allocation4], 1

</llo_original>
